<compile_context>
chip_gen: v7x
topology: tpu7x:2x2x1
jax: 0.10.0
libtpu: 0.0.40
codegen_flags: <defaults>
</compile_context>

<pallas_src>
import functools

import jax
import jax.numpy as jnp
from jax.experimental import pallas as pl
from jax.experimental.pallas import tpu as pltpu


# ---------------- Pallas kernel: grouped (token-gathered) expert FFN ----------------

def _grouped_ffn_kernel(tile_expert_ref,            # scalar prefetch (SMEM); used by index_maps
                        x_ref, w13_ref, w2_ref,     # VMEM inputs
                        out_ref,                    # output tile (input dtype)
                        acc_ref):                   # resident f32 VMEM accumulator
    # grid = (num_group_tiles, num_ff).  Each group tile holds tokens routed to ONE
    # expert (tile_expert_ref[g]); the ff axis is a reduction into the f32 accumulator,
    # and the output is written once (cast) on the last ff step.
    f = pl.program_id(1)
    n_f = pl.num_programs(1)

    @pl.when(f == 0)
    def _():
        acc_ref[...] = jnp.zeros_like(acc_ref)

    tf = w2_ref.shape[0]                            # tile_ff (static)
    x = x_ref[...]                                  # (tile_t, D), native dtype
    # single fused gate+up projection: (tile_t, D) @ (D, 2*tile_ff), f32 accumulation
    h = jnp.dot(x, w13_ref[...], preferred_element_type=jnp.float32)
    h1 = h[:, :tf]                                  # gate proj
    h3 = h[:, tf:]                                  # up proj
    act = h1 * jax.nn.sigmoid(h1) * h3              # SiLU(gate) * up, f32
    acc_ref[...] += jnp.dot(act.astype(w2_ref.dtype), w2_ref[...],
                            preferred_element_type=jnp.float32)

    @pl.when(f == n_f - 1)
    def _():
        out_ref[...] = acc_ref[...].astype(out_ref.dtype)


# ---------------- Tile-size / VMEM selection ----------------

def _round_up(n, q):
    return ((n + q - 1) // q) * q


def _largest_tile(n, max_tile, quantum):
    """Largest divisor of n that is a multiple of `quantum` and <= max_tile;
    falls back to n itself (full-dim block is always legal)."""
    t = min(max_tile, (n // quantum) * quantum)
    while t >= quantum:
        if n % t == 0:
            return t
        t -= quantum
    return n


def _ffn_vmem_bytes(tile_t, tile_ff, D, act_bytes, w_bytes):
    x_buf = 2 * tile_t * D * act_bytes              # double-buffered activation tile
    w13_buf = 2 * D * (2 * tile_ff) * w_bytes       # double-buffered fused gate/up tile
    w2_buf = 2 * tile_ff * D * w_bytes              # double-buffered down-proj tile
    out_buf = 2 * tile_t * D * act_bytes            # double-buffered output tile
    acc = tile_t * D * 4                            # resident f32 accumulator
    return x_buf + w13_buf + w2_buf + out_buf + acc


def _select_ffn_tiles(slots, D, FF, E, act_bytes, w_bytes):
    # Re-derive the VMEM budget per TPU generation (v7x has 64 MiB/TC vs 128 MiB).
    try:
        vmem_phys = pltpu.get_tpu_info().vmem_capacity_bytes
    except Exception:
        vmem_phys = 64 << 20
    if vmem_phys >= (100 << 20):        # v5e / v6e (128 MiB physical VMEM)
        target_t, target_ff, vmem_limit = 512, 512, 96 << 20
    else:                               # v7x (64 MiB per TensorCore)
        target_t, target_ff, vmem_limit = 256, 256, 48 << 20
    budget = int(vmem_limit * 0.75)     # headroom for compiler-internal scratch

    sublane = 8 if act_bytes >= 4 else 16          # native sublane tile for the dtype
    tile_ff = _largest_tile(FF, target_ff, 128)
    # token tile capped by the average per-expert group size (bigger = mostly padding)
    avg_group = max(1, slots // max(E, 1))
    tile_t = max(sublane, min(target_t, _round_up(avg_group, sublane)))

    while _ffn_vmem_bytes(tile_t, tile_ff, D, act_bytes, w_bytes) > budget:
        if tile_t > sublane:
            tile_t = max(sublane, tile_t // 2)
            continue
        new_ff = _largest_tile(FF, max(128, tile_ff // 2), 128)
        if new_ff == tile_ff:
            break
        tile_ff = new_ff
    return tile_t, tile_ff, vmem_limit


# ---------------- Wrapper ----------------

@functools.partial(jax.jit, static_argnames=("top_k",))
def mixtral_sparse_moe(hidden_states, gate_w, w1, w3, w2, *, top_k):
    """hidden_states: (B, S, D); gate_w: (E, D) f32; w1/w3: (E, D, FF); w2: (E, FF, D)."""
    B, S, D = hidden_states.shape
    E = gate_w.shape[0]
    FF = w1.shape[-1]
    T = B * S
    input_dtype = hidden_states.dtype

    # TODO(synk): jitter_noise_ > 0 (training-time multiplicative noise) not implemented;
    # forward assumes jitter_noise_ == 0 like the eval path of the module.
    x = hidden_states.reshape(T, D)                 # native dtype (bf16 stays bf16)

    # --- router (gate_ runs in float32, like the module).  Left to XLA: the (T, D)@(D, E)
    # matmul with tiny E is lane-sparse on the MXU and fuses with the softmax/top_k glue.
    router_logits = jnp.dot(x.astype(jnp.float32), gate_w.T.astype(jnp.float32))   # (T, E)

    # --- softmax / top-k / renormalize (tiny O(T*E) routing glue; stays in XLA) ---
    # TODO(synk): softmax/top_k/argsort/scatter routing glue has no clean Pallas TPU
    # equivalent and is left to XLA.
    probs = jax.nn.softmax(router_logits, axis=-1)
    rw, sel = jax.lax.top_k(probs, top_k)                      # (T, k)
    rw = rw / jnp.sum(rw, axis=-1, keepdims=True)

    # --- grouped-GEMM layout: sort (token, expert) pairs by expert, pad each expert's
    # group to a multiple of tile_t, gather token rows. ---
    slots = T * top_k
    tile_t, tile_ff, vmem_limit = _select_ffn_tiles(
        slots, D, FF, E,
        jnp.dtype(input_dtype).itemsize, jnp.dtype(w1.dtype).itemsize)
    num_ff = FF // tile_ff
    num_gtiles = pl.cdiv(slots, tile_t) + E - 1      # static worst case over routings
    C = num_gtiles * tile_t                          # padded slot capacity

    flat_e = sel.reshape(-1).astype(jnp.int32)                                # (slots,)
    flat_tok = jnp.repeat(jnp.arange(T, dtype=jnp.int32), top_k)              # (slots,)
    flat_rw = rw.reshape(-1)                                                  # (slots,)
    order = jnp.argsort(flat_e)
    srt_e, srt_tok, srt_rw = flat_e[order], flat_tok[order], flat_rw[order]

    counts = jnp.bincount(flat_e, length=E).astype(jnp.int32)                 # per-expert
    padded = ((counts + tile_t - 1) // tile_t) * tile_t
    starts = jnp.concatenate([jnp.zeros((1,), jnp.int32), jnp.cumsum(counts)[:-1]])
    pstarts = jnp.concatenate([jnp.zeros((1,), jnp.int32), jnp.cumsum(padded)[:-1]])
    rank = jnp.arange(slots, dtype=jnp.int32) - starts[srt_e]
    dest = pstarts[srt_e] + rank                                              # unique, < C

    slot_tok = jnp.zeros((C,), jnp.int32).at[dest].set(srt_tok)     # padding -> token 0
    slot_rw = jnp.zeros((C,), jnp.float32).at[dest].set(srt_rw)     # padding -> weight 0
    x_grp = jnp.take(x, slot_tok, axis=0)                           # (C, D) token gather

    # expert owning each group tile (scalar-prefetched into SMEM for the data-dependent
    # weight index_maps); all-padding trailing tiles clamp to expert E-1 (contribute 0).
    ends = jnp.cumsum(padded)
    tile_starts = jnp.arange(num_gtiles, dtype=jnp.int32) * tile_t
    tile_expert = jnp.minimum(
        jnp.sum((tile_starts[:, None] >= ends[None, :]).astype(jnp.int32), axis=1),
        E - 1).astype(jnp.int32)

    # fused gate/up weights, interleaved per ff tile so one (D, 2*tile_ff) block holds
    # [w1 tile f | w3 tile f] -> a single wide MXU dot and half the weight DMAs per step.
    w13 = jnp.concatenate(
        [w1.reshape(E, D, num_ff, tile_ff), w3.reshape(E, D, num_ff, tile_ff)],
        axis=-1).reshape(E, D, 2 * FF)

    # --- grouped expert FFN (Pallas hot path) ---
    # TODO(synk): bump the weight BlockSpecs to pipeline_mode=pl.Buffered(3) if a profile
    # shows exposed weight-DMA time; left at the default depth of 2.
    out_grp = pl.pallas_call(
        _grouped_ffn_kernel,
        out_shape=jax.ShapeDtypeStruct((C, D), input_dtype),
        grid_spec=pltpu.PrefetchScalarGridSpec(
            num_scalar_prefetch=1,
            grid=(num_gtiles, num_ff),
            in_specs=[
                pl.BlockSpec((tile_t, D), lambda g, f, te: (g, 0)),
                pl.BlockSpec((pl.Squeezed(), D, 2 * tile_ff),
                             lambda g, f, te: (te[g], 0, f)),
                pl.BlockSpec((pl.Squeezed(), tile_ff, D),
                             lambda g, f, te: (te[g], f, 0)),
            ],
            out_specs=pl.BlockSpec((tile_t, D), lambda g, f, te: (g, 0)),
            scratch_shapes=[pltpu.VMEM((tile_t, D), jnp.float32)],
        ),
        compiler_params=pltpu.CompilerParams(
            dimension_semantics=("parallel", "arbitrary"),
            vmem_limit_bytes=vmem_limit),
    )(tile_expert, x_grp, w13, w2)

    # --- weighted scatter-add back to token order (f32, like the module), final cast ---
    contrib = out_grp.astype(jnp.float32) * slot_rw[:, None]
    final = jnp.zeros((T, D), jnp.float32).at[slot_tok].add(contrib)
    return final.reshape(B, S, D).astype(input_dtype), router_logits


# ---------------- Pure-JAX reference (for correctness check) ----------------

def _reference(hidden_states, gate_w, w1, w3, w2, top_k):
    B, S, D = hidden_states.shape
    E = gate_w.shape[0]
    T = B * S
    x = hidden_states.reshape(T, D).astype(jnp.float32)
    logits = x @ gate_w.T.astype(jnp.float32)
    probs = jax.nn.softmax(logits, axis=-1)
    rw, sel = jax.lax.top_k(probs, top_k)
    rw = rw / jnp.sum(rw, axis=-1, keepdims=True)
    dense = jnp.zeros((T, E), jnp.float32).at[jnp.arange(T)[:, None], sel].add(rw)
    out = jnp.zeros((T, D), jnp.float32)
    for e in range(E):
        h1 = x @ w1[e].astype(jnp.float32)
        h3 = x @ w3[e].astype(jnp.float32)
        y = (h1 * jax.nn.sigmoid(h1) * h3) @ w2[e].astype(jnp.float32)
        out = out + dense[:, e:e + 1] * y
    return out.reshape(B, S, D).astype(hidden_states.dtype), logits


# ---------------- Main ----------------

if __name__ == "__main__":
    B, S, D, FF = 2, 8, 32, 64      # batch, seq, hidden dim, intermediate dim
    E, TOP_K = 4, 2                 # num_experts_, top_k_

    key = jax.random.PRNGKey(0)
    k_x, k_g, k_1, k_3, k_2 = jax.random.split(key, 5)

    hidden_states = jax.random.normal(k_x, (B, S, D), dtype=jnp.float32)
    gate_w = jax.random.normal(k_g, (E, D), dtype=jnp.float32) * 0.1   # nn.Linear(D, E)
    w1 = jax.random.normal(k_1, (E, D, FF), dtype=jnp.float32) * 0.1   # gate_proj per expert
    w3 = jax.random.normal(k_3, (E, D, FF), dtype=jnp.float32) * 0.1   # up_proj per expert
    w2 = jax.random.normal(k_2, (E, FF, D), dtype=jnp.float32) * 0.1   # down_proj per expert

    # float32 correctness check against the pure-JAX reference
    final, router_logits = mixtral_sparse_moe(hidden_states, gate_w, w1, w3, w2,
                                              top_k=TOP_K)
    final = jax.block_until_ready(final)
    router_logits = jax.block_until_ready(router_logits)

    ref_final, ref_logits = _reference(hidden_states, gate_w, w1, w3, w2, TOP_K)
    assert final.shape == (B, S, D) and router_logits.shape == (B * S, E)
    assert jnp.allclose(final, ref_final, atol=1e-4, rtol=1e-4)
    assert jnp.allclose(router_logits, ref_logits, atol=1e-4, rtol=1e-4)

    # bf16 path: native-dtype MXU inputs, f32 accumulation, bf16 output.  Loose tolerance
    # check against the f32 reference on the same bf16-cast inputs.
    hs_bf = hidden_states.astype(jnp.bfloat16)
    w1_bf, w3_bf, w2_bf = (w1.astype(jnp.bfloat16), w3.astype(jnp.bfloat16),
                           w2.astype(jnp.bfloat16))
    final_bf, logits_bf = mixtral_sparse_moe(hs_bf, gate_w, w1_bf, w3_bf, w2_bf,
                                             top_k=TOP_K)
    final_bf = jax.block_until_ready(final_bf)
    ref_bf, _ = _reference(hs_bf, gate_w, w1_bf, w3_bf, w2_bf, TOP_K)
    assert final_bf.shape == (B, S, D) and final_bf.dtype == jnp.bfloat16
    assert bool(jnp.isfinite(final_bf.astype(jnp.float32)).all())
    assert jnp.allclose(final_bf.astype(jnp.float32), ref_bf.astype(jnp.float32),
                        atol=5e-2, rtol=5e-2)

    print("KERNEL_OK")
</pallas_src>

<mosaic_0001>
module attributes {stable_mosaic.version = 11 : i64} {
  func.func private @main(%arg0: i32) attributes {dimension_semantics = [#tpu.dimension_semantics<core_parallel>], iteration_bounds = array<i64: 2>, tpu.core_type = #tpu.core_type<sc_scalar_subcore>, window_params = []} {
    return
  }
}

module attributes {stable_mosaic.version = 11 : i64} {
  func.func private @main(%arg0: i32) attributes {dimension_semantics = [#tpu.dimension_semantics<core_parallel>], iteration_bounds = array<i64: 2>, tpu.core_type = #tpu.core_type<sc_scalar_subcore>, window_params = []} {
    return
  }
}

module attributes {stable_mosaic.version = 11 : i64} {
  func.func @_grouped_ffn_kernel(%arg0: i32, %arg1: i32, %arg2: memref<7xi32, #tpu.memory_space<smem>>, %arg3: memref<8x32xf32, #tpu.memory_space<vmem>>, %arg4: memref<1x32x128xf32, #tpu.memory_space<vmem>>, %arg5: memref<1x64x32xf32, #tpu.memory_space<vmem>>, %arg6: memref<8x32xf32, #tpu.memory_space<vmem>>, %arg7: memref<8x32xf32, #tpu.memory_space<vmem>>) attributes {dimension_semantics = [#tpu.dimension_semantics<parallel>, #tpu.dimension_semantics<arbitrary>], iteration_bounds = array<i64: 7, 1>, scalar_prefetch = 1 : i64, scratch_operands = 1 : i64, tpu.core_type = #tpu.core_type<tc>, window_params = [{transform_indices = @transform_0, window_bounds = array<i64: 8, 32>}, {transform_indices = @transform_1, window_bounds = array<i64: 1, 32, 128>}, {transform_indices = @transform_2, window_bounds = array<i64: 1, 64, 32>}, {transform_indices = @transform_3, window_bounds = array<i64: 8, 32>}]} {
    %c0_i32 = arith.constant 0 : i32
    %0 = arith.cmpi eq, %arg1, %c0_i32 : i32
    %1 = arith.extui %0 : i1 to i32
    %c0_i32_0 = arith.constant 0 : i32
    %2 = arith.cmpi ne, %1, %c0_i32_0 : i32
    scf.if %2 {
      %cst_16 = arith.constant 0.000000e+00 : f32
      %25 = vector.broadcast %cst_16 : f32 to vector<8x32xf32>
      %c0_17 = arith.constant 0 : index
      %c0_18 = arith.constant 0 : index
      %26 = vector.load %arg7[%c0_17, %c0_18] : memref<8x32xf32, #tpu.memory_space<vmem>>, vector<8x32xf32>
      tpu.vector_store %arg7[%c0_17, %c0_18], %25 {strides = array<i32>} : memref<8x32xf32, #tpu.memory_space<vmem>>, vector<8x32xf32>,
    } else {
    }
    %c0 = arith.constant 0 : index
    %c0_1 = arith.constant 0 : index
    %3 = vector.load %arg3[%c0, %c0_1] : memref<8x32xf32, #tpu.memory_space<vmem>>, vector<8x32xf32>
    %c0_2 = arith.constant 0 : index
    %c0_3 = arith.constant 0 : index
    %c0_4 = arith.constant 0 : index
    %4 = vector.load %arg4[%c0_2, %c0_3, %c0_4] : memref<1x32x128xf32, #tpu.memory_space<vmem>>, vector<1x32x128xf32>
    %5 = vector.shape_cast %4 : vector<1x32x128xf32> to vector<32x128xf32>
    %cst = arith.constant dense<0.000000e+00> : vector<8x128xf32>
    %6 = tpu.matmul %3, %5, %cst {dimension_numbers = #tpu.dot_dimension_numbers<[1], [0], [0], [1], [0, 0, 1, 1], [], []>} : vector<8x32xf32>, vector<32x128xf32>, vector<8x128xf32> -> vector<8x128xf32>
    %7 = vector.extract_strided_slice %6 {offsets = [0, 0], sizes = [8, 64], strides = [1, 1]} : vector<8x128xf32> to vector<8x64xf32>
    %8 = vector.extract_strided_slice %6 {offsets = [0, 64], sizes = [8, 64], strides = [1, 1]} : vector<8x128xf32> to vector<8x64xf32>
    %9 = arith.negf %7 : vector<8x64xf32>
    %10 = math.exp %9 : vector<8x64xf32>
    %cst_5 = arith.constant 1.000000e+00 : f32
    %11 = vector.broadcast %cst_5 : f32 to vector<8x64xf32>
    %12 = arith.addf %11, %10 : vector<8x64xf32>
    %13 = arith.divf %11, %12 : vector<8x64xf32>
    %14 = arith.mulf %7, %13 : vector<8x64xf32>
    %15 = arith.mulf %14, %8 : vector<8x64xf32>
    %c0_6 = arith.constant 0 : index
    %c0_7 = arith.constant 0 : index
    %16 = vector.load %arg7[%c0_6, %c0_7] : memref<8x32xf32, #tpu.memory_space<vmem>>, vector<8x32xf32>
    %c0_8 = arith.constant 0 : index
    %c0_9 = arith.constant 0 : index
    %c0_10 = arith.constant 0 : index
    %17 = vector.load %arg5[%c0_8, %c0_9, %c0_10] : memref<1x64x32xf32, #tpu.memory_space<vmem>>, vector<1x64x32xf32>
    %18 = vector.shape_cast %17 : vector<1x64x32xf32> to vector<64x32xf32>
    %cst_11 = arith.constant dense<0.000000e+00> : vector<8x32xf32>
    %19 = tpu.matmul %15, %18, %cst_11 {dimension_numbers = #tpu.dot_dimension_numbers<[1], [0], [0], [1], [0, 0, 1, 1], [], []>} : vector<8x64xf32>, vector<64x32xf32>, vector<8x32xf32> -> vector<8x32xf32>
    %20 = arith.addf %16, %19 : vector<8x32xf32>
    %c0_12 = arith.constant 0 : index
    %c0_13 = arith.constant 0 : index
    %21 = vector.load %arg7[%c0_12, %c0_13] : memref<8x32xf32, #tpu.memory_space<vmem>>, vector<8x32xf32>
    tpu.vector_store %arg7[%c0_12, %c0_13], %20 {strides = array<i32>} : memref<8x32xf32, #tpu.memory_space<vmem>>, vector<8x32xf32>,
    %c0_i32_14 = arith.constant 0 : i32
    %22 = arith.cmpi eq, %arg1, %c0_i32_14 : i32
    %23 = arith.extui %22 : i1 to i32
    %c0_i32_15 = arith.constant 0 : i32
    %24 = arith.cmpi ne, %23, %c0_i32_15 : i32
    scf.if %24 {
      %c0_16 = arith.constant 0 : index
      %c0_17 = arith.constant 0 : index
      %25 = vector.load %arg7[%c0_16, %c0_17] : memref<8x32xf32, #tpu.memory_space<vmem>>, vector<8x32xf32>
      %c0_18 = arith.constant 0 : index
      %c0_19 = arith.constant 0 : index
      %26 = vector.load %arg6[%c0_18, %c0_19] : memref<8x32xf32, #tpu.memory_space<vmem>>, vector<8x32xf32>
      tpu.vector_store %arg6[%c0_18, %c0_19], %25 {strides = array<i32>} : memref<8x32xf32, #tpu.memory_space<vmem>>, vector<8x32xf32>,
    } else {
    }
    return
  }
  func.func @transform_0(%arg0: i32, %arg1: i32, %arg2: memref<7xi32, #tpu.memory_space<smem>>) -> (i32, i32) {
    %c0_i32 = arith.constant 0 : i32
    %c0_i32_0 = arith.constant 0 : i32
    return %arg0, %c0_i32 : i32, i32
  }
  func.func @transform_1(%arg0: i32, %arg1: i32, %arg2: memref<7xi32, #tpu.memory_space<smem>>) -> (i32, i32, i32) {
    %0 = arith.index_cast %arg0 : i32 to index
    %1 = memref.load %arg2[%0] : memref<7xi32, #tpu.memory_space<smem>>
    %c0_i32 = arith.constant 0 : i32
    %c0_i32_0 = arith.constant 0 : i32
    return %1, %c0_i32, %arg1 : i32, i32, i32
  }
  func.func @transform_2(%arg0: i32, %arg1: i32, %arg2: memref<7xi32, #tpu.memory_space<smem>>) -> (i32, i32, i32) {
    %0 = arith.index_cast %arg0 : i32 to index
    %1 = memref.load %arg2[%0] : memref<7xi32, #tpu.memory_space<smem>>
    %c0_i32 = arith.constant 0 : i32
    %c0_i32_0 = arith.constant 0 : i32
    return %1, %arg1, %c0_i32 : i32, i32, i32
  }
  func.func @transform_3(%arg0: i32, %arg1: i32, %arg2: memref<7xi32, #tpu.memory_space<smem>>) -> (i32, i32) {
    %c0_i32 = arith.constant 0 : i32
    %c0_i32_0 = arith.constant 0 : i32
    return %arg0, %c0_i32 : i32, i32
  }
}

</mosaic_0001>

<llo_original>
// kernel: mixtral_sparse_moe.1
$region0: #{mixtral_sparse_moe.1}
  #allocation0 [shape = 'u32[]', space=smem, size = 0x4, offset = 0x4, fixed_abs, tag = 'smem constant byte address 0x4 - core index']
  #allocation1 [shape = 'u32[144,128]{1,0:T(1,128)}', space=vmem, size = 0x12000, scoped, tag = 'internal scratch']
  #allocation2 [shape = 'f32[8,32]{1,0:T(8,128)}', space=vmem, size = 0x1000, scoped, tag = 'scratch operand']
  #allocation3 [shape = 's32[1]{0}', space=sflag, size = 0x4, scoped, tag = 'scoped memory for mixtral_sparse_moe.1']
  #allocation4 [shape = 'u8[512]{0}', space=smem, size = 0x200, scoped, tag = 'prefetched SMEM operand 0']
  %s0 = inlined_call_operand.vmem [shape: s32[7], index: 0, kind: input, shape index: {}]
  %s1 = inlined_call_operand.vmem [shape: f32[56,32], index: 1, kind: input, shape index: {}]
  %s2 = inlined_call_operand.vmem [shape: f32[4,32,128], index: 2, kind: input, shape index: {}]
  %s3 = inlined_call_operand.vmem [shape: f32[4,64,32], index: 3, kind: input, shape index: {}]
  %s4 = inlined_call_operand.vmem [shape: f32[56,32], index: 4, kind: output, shape index: {}]
  %s5 = sld [smem:[#allocation0]]
  $region53: #{mixtral_sparse_moe.1} parent=0
    _
  %s7 = ssub.s32 1, %s5
  %s8 = scalar_select 0, %s7, %s5
  %s9 = sshll.u32 %s0, 4
  %s10 = int_to_ptr.vmem [resolvable:$true] %s9
  %12 = dma.vmem_to_smem %s10, 16, [#allocation4], [#allocation3]
  %13 = dma.done [#allocation3], 16
  %14 = sfence
  loop: start=0, step=1, limit=9
  $region2: #{mixtral_sparse_moe.1} parent=0 // loop_pre_header
    _
  $region3: #{mixtral_sparse_moe.1} parent=0 // loop_header
    %s16 = sphi 0, %s20
    %p17 = scmp.ge.s32.totalorder %s16, 9
    %s23 = sphi 0, %s35
    %s24 = sphi 0, %s31
    %s25 = sphi 0, %s23
    %s26 = sphi 0, %s24
    %s27 = sphi 0, %s25
    %s28 = sphi 0, %s26
    %s38 = sphi 0, %s40
    %s41 = sphi 0, %s38
    %s42 = sphi 0, %s41
    %s58 = sphi 0, %s42
    %s68 = sphi 0, %s70
    %s71 = sphi 0, %s68
    %s72 = sphi 0, %s71
    %s88 = sphi 0, %s72
    %s98 = sphi 0, %s100
    %s101 = sphi 0, %s98
    %s102 = sphi 0, %s101
    %s118 = sphi 0, %s102
    %s124 = sphi 0, %s126
    %s127 = sphi 0, %s124
    %s128 = sphi 0, %s127
    %s144 = sphi 0, %s128
  $region4: #{mixtral_sparse_moe.1} parent=0 // loop_header_branch
    %19 = sbr.rel (%p17) target = $region8
  $region5: #{mixtral_sparse_moe.1} parent=0 // loop_body
    %s21 = ssub.s32 %s16, 1
    %s22 = ssub.s32 %s16, 2
    %s29 = sadd.s32 1, %s24
    %p30 = scmp.ge.s32.totalorder %s29, 1
    %s31 = scalar_select %p30, 0, %s29
    %s32 = sadd.s32 1, %s23
    %s33 = scalar_select %p30, %s32, %s23
    %p34 = scmp.ge.s32.totalorder %s33, 7
    %s35 = scalar_select %p34, 0, %s33
    %s36 = ssub.s32 %s23, %s35
    %p37 = scmp.eq.s32.totalorder %s36, 0
    %s39 = sadd.s32 %s38, 1
    %s40 = scalar_select %p37, %s38, %s39
    %p43 = pneg %p37
    %p44 = scmp.eq.s32.totalorder %s16, 6
    %p45 = por %p43, %p44
    %p46 = scmp.ne.s32.totalorder %s38, %s41
    %p47 = scmp.eq.s32.totalorder %s16, 0
    %p48 = por %p46, %p47
    %p49 = scmp.ne.s32.totalorder %s38, %s41
    %p50 = scmp.eq.s32.totalorder %s21, 6
    %p51 = por %p49, %p50
    %p52 = scmp.ne.s32.totalorder %s41, %s42
    %p53 = scmp.eq.s32.totalorder %s21, 0
    %p54 = por %p52, %p53
    %p55 = scmp.ne.s32.totalorder %s41, %s42
    %p56 = scmp.eq.s32.totalorder %s22, 6
    %p57 = por %p55, %p56
    %p59 = scmp.ne.s32.totalorder %s42, %s58
    %p60 = scmp.eq.s32.totalorder %s22, 0
    %p61 = por %p59, %p60
    %s62 = sld [smem:[#allocation4 + %s23]]
    %s63 = sld [smem:[#allocation4 + %s35]]
    %s64 = ssub.s32 %s62, %s63
    %s65 = ssub.s32 %s24, %s31
    %s66 = sor.u32 %s64, %s65
    %p67 = scmp.eq.s32.totalorder %s66, 0
    %s69 = sadd.s32 %s68, 1
    %s70 = scalar_select %p67, %s68, %s69
    %p73 = pneg %p67
    %p74 = scmp.eq.s32.totalorder %s16, 6
    %p75 = por %p73, %p74
    %p76 = scmp.ne.s32.totalorder %s68, %s71
    %p77 = scmp.eq.s32.totalorder %s16, 0
    %p78 = por %p76, %p77
    %p79 = scmp.ne.s32.totalorder %s68, %s71
    %p80 = scmp.eq.s32.totalorder %s21, 6
    %p81 = por %p79, %p80
    %p82 = scmp.ne.s32.totalorder %s71, %s72
    %p83 = scmp.eq.s32.totalorder %s21, 0
    %p84 = por %p82, %p83
    %p85 = scmp.ne.s32.totalorder %s71, %s72
    %p86 = scmp.eq.s32.totalorder %s22, 6
    %p87 = por %p85, %p86
    %p89 = scmp.ne.s32.totalorder %s72, %s88
    %p90 = scmp.eq.s32.totalorder %s22, 0
    %p91 = por %p89, %p90
    %s92 = sld [smem:[#allocation4 + %s23]]
    %s93 = sld [smem:[#allocation4 + %s35]]
    %s94 = ssub.s32 %s92, %s93
    %s95 = ssub.s32 %s24, %s31
    %s96 = sor.u32 %s94, %s95
    %p97 = scmp.eq.s32.totalorder %s96, 0
    %s99 = sadd.s32 %s98, 1
    %s100 = scalar_select %p97, %s98, %s99
    %p103 = pneg %p97
    %p104 = scmp.eq.s32.totalorder %s16, 6
    %p105 = por %p103, %p104
    %p106 = scmp.ne.s32.totalorder %s98, %s101
    %p107 = scmp.eq.s32.totalorder %s16, 0
    %p108 = por %p106, %p107
    %p109 = scmp.ne.s32.totalorder %s98, %s101
    %p110 = scmp.eq.s32.totalorder %s21, 6
    %p111 = por %p109, %p110
    %p112 = scmp.ne.s32.totalorder %s101, %s102
    %p113 = scmp.eq.s32.totalorder %s21, 0
    %p114 = por %p112, %p113
    %p115 = scmp.ne.s32.totalorder %s101, %s102
    %p116 = scmp.eq.s32.totalorder %s22, 6
    %p117 = por %p115, %p116
    %p119 = scmp.ne.s32.totalorder %s102, %s118
    %p120 = scmp.eq.s32.totalorder %s22, 0
    %p121 = por %p119, %p120
    %s122 = ssub.s32 %s23, %s35
    %p123 = scmp.eq.s32.totalorder %s122, 0
    %s125 = sadd.s32 %s124, 1
    %s126 = scalar_select %p123, %s124, %s125
    %p129 = pneg %p123
    %p130 = scmp.eq.s32.totalorder %s16, 6
    %p131 = por %p129, %p130
    %p132 = scmp.ne.s32.totalorder %s124, %s127
    %p133 = scmp.eq.s32.totalorder %s16, 0
    %p134 = por %p132, %p133
    %p135 = scmp.ne.s32.totalorder %s124, %s127
    %p136 = scmp.eq.s32.totalorder %s21, 6
    %p137 = por %p135, %p136
    %p138 = scmp.ne.s32.totalorder %s127, %s128
    %p139 = scmp.eq.s32.totalorder %s21, 0
    %p140 = por %p138, %p139
    %p141 = scmp.ne.s32.totalorder %s127, %s128
    %p142 = scmp.eq.s32.totalorder %s22, 6
    %p143 = por %p141, %p142
    %p145 = scmp.ne.s32.totalorder %s128, %s144
    %p146 = scmp.eq.s32.totalorder %s22, 0
    %p147 = por %p145, %p146
    %p148 = scmp.le.s32.totalorder 1, %s16
    %p149 = scmp.lt.s32.totalorder %s16, 8
    %p150 = pnand %p148, %p149
    %p151 = pneg %p150
    // Predicated region
    $region9: #{mixtral_sparse_moe.1} parent=5 // pred_check
      _
    $region10: #{mixtral_sparse_moe.1} parent=5 // pred_check_branch
      %153 = sbr.rel (%p150) target = $region12
    $region11: #{mixtral_sparse_moe.1} parent=5 // pred_region
      %s154 = ssub.s32 %s16, 1
    $region12: #{mixtral_sparse_moe.1} parent=5 // pred_fallthru
      _
    %p155 = scmp.lt.s32.totalorder %s16, 7
    // Predicated region
    $region13: #{mixtral_sparse_moe.1} parent=5 // pred_check
      %p156 = pneg %p155
    $region14: #{mixtral_sparse_moe.1} parent=5 // pred_check_branch
      %158 = sbr.rel (%p156) target = $region16
    $region15: #{mixtral_sparse_moe.1} parent=5 // pred_region
      // Predicated region
      $region17: #{mixtral_sparse_moe.1} parent=15 // pred_check
        %p159 = pneg %p48
      $region18: #{mixtral_sparse_moe.1} parent=15 // pred_check_branch
        %161 = sbr.rel (%p159) target = $region20
      $region19: #{mixtral_sparse_moe.1} parent=15 // pred_region
        %p162 = scmp.lt.s32.totalorder %s23, 6
        %s163 = scalar_select %p162, %s23, 6
        %s164 = smul.addr %s163, 8
        %s165 = scalar_lea.vmem %s1, %s164
      $region20: #{mixtral_sparse_moe.1} parent=15 // pred_fallthru
        _
      // Predicated region
      $region21: #{mixtral_sparse_moe.1} parent=15 // pred_check
        %p166 = pneg %p78
      $region22: #{mixtral_sparse_moe.1} parent=15 // pred_check_branch
        %168 = sbr.rel (%p166) target = $region24
      $region23: #{mixtral_sparse_moe.1} parent=15 // pred_region
        %s169 = sld [smem:[#allocation4 + %s23]]
        %p170 = scmp.lt.s32.totalorder %s169, 3
        %s171 = scalar_select %p170, %s169, 3
        %p172 = scmp.lt.s32.totalorder %s24, 0
        %s173 = scalar_select %p172, %s24, 0
        %s174 = smul.addr %s171, 4
        %s175 = sadd.s32 %s173, %s174
        %s176 = smul.addr %s175, 8
        %s177 = scalar_lea.vmem %s2, %s176
        %s178 = sld [smem:[#allocation4 + %s23]]
      $region24: #{mixtral_sparse_moe.1} parent=15 // pred_fallthru
        _
      // Predicated region
      $region25: #{mixtral_sparse_moe.1} parent=15 // pred_check
        %p179 = pneg %p108
      $region26: #{mixtral_sparse_moe.1} parent=15 // pred_check_branch
        %181 = sbr.rel (%p179) target = $region28
      $region27: #{mixtral_sparse_moe.1} parent=15 // pred_region
        %s182 = sld [smem:[#allocation4 + %s23]]
        %s183 = smul.u32 8, %s24
        %p184 = scmp.lt.s32.totalorder %s182, 3
        %s185 = scalar_select %p184, %s182, 3
        %p186 = scmp.lt.s32.totalorder %s183, 7
        %s187 = scalar_select %p186, %s183, 7
        %s188 = smul.addr %s185, 8
        %s189 = sadd.s32 %s187, %s188
        %s190 = smul.addr %s189, 8
        %s191 = scalar_lea.vmem %s3, %s190
        %s192 = sld [smem:[#allocation4 + %s23]]
        %s193 = smul.u32 8, %s24
      $region28: #{mixtral_sparse_moe.1} parent=15 // pred_fallthru
        _
    $region16: #{mixtral_sparse_moe.1} parent=5 // pred_fallthru
      _
    %p194 = scmp.le.s32.totalorder 1, %s16
    %p195 = scmp.lt.s32.totalorder %s16, 8
    %p196 = pnand %p194, %p195
    %p197 = pneg %p196
    // Predicated region
    $region29: #{mixtral_sparse_moe.1} parent=5 // pred_check
      _
    $region30: #{mixtral_sparse_moe.1} parent=5 // pred_check_branch
      %199 = sbr.rel (%p196) target = $region32
    $region31: #{mixtral_sparse_moe.1} parent=5 // pred_region
      %s200 = ssub.s32 %s16, 1
      %p201 = scmp.lt.s32.totalorder %s25, 6
      %s202 = scalar_select %p201, %s25, 6
      %s203 = smul.addr %s202, 8
      %s204 = scalar_lea.vmem %s1, %s203
      %p205 = pneg %p54
      %p206 = pneg %p51
      %s207 = sld [smem:[#allocation4 + %s25]]
      %p208 = scmp.lt.s32.totalorder %s207, 3
      %s209 = scalar_select %p208, %s207, 3
      %p210 = scmp.lt.s32.totalorder %s26, 0
      %s211 = scalar_select %p210, %s26, 0
      %s212 = smul.addr %s209, 4
      %s213 = sadd.s32 %s211, %s212
      %s214 = smul.addr %s213, 8
      %s215 = scalar_lea.vmem %s2, %s214
      %p216 = pneg %p84
      %p217 = pneg %p81
      %s218 = sld [smem:[#allocation4 + %s25]]
      %s219 = smul.u32 8, %s26
      %p220 = scmp.lt.s32.totalorder %s218, 3
      %s221 = scalar_select %p220, %s218, 3
      %p222 = scmp.lt.s32.totalorder %s219, 7
      %s223 = scalar_select %p222, %s219, 7
      %s224 = smul.addr %s221, 8
      %s225 = sadd.s32 %s223, %s224
      %s226 = smul.addr %s225, 8
      %s227 = scalar_lea.vmem %s3, %s226
      %p228 = pneg %p114
      %p229 = pneg %p111
      %p230 = pneg %p140
      %p231 = pneg %p137
      %p232 = scmp.lt.s32.totalorder %s25, 6
      %s233 = scalar_select %p232, %s25, 6
      %s234 = smul.addr %s233, 8
      %s235 = scalar_lea.vmem %s4, %s234
      %p236 = scmp.lt.s32.totalorder %s25, 6
      %s237 = scalar_select %p236, %s25, 6
      %s238 = smul.addr %s237, 8
      %s239 = scalar_lea.vmem %s1, %s238
      %s240 = sld [smem:[#allocation4 + %s25]]
      %p241 = scmp.lt.s32.totalorder %s240, 3
      %s242 = scalar_select %p241, %s240, 3
      %p243 = scmp.lt.s32.totalorder %s26, 0
      %s244 = scalar_select %p243, %s26, 0
      %s245 = smul.addr %s242, 4
      %s246 = sadd.s32 %s244, %s245
      %s247 = smul.addr %s246, 8
      %s248 = scalar_lea.vmem %s2, %s247
      %s249 = sld [smem:[#allocation4 + %s25]]
      %s250 = sld [smem:[#allocation4 + %s25]]
      %s251 = smul.u32 8, %s26
      %p252 = scmp.lt.s32.totalorder %s250, 3
      %s253 = scalar_select %p252, %s250, 3
      %p254 = scmp.lt.s32.totalorder %s251, 7
      %s255 = scalar_select %p254, %s251, 7
      %s256 = smul.addr %s253, 8
      %s257 = sadd.s32 %s255, %s256
      %s258 = smul.addr %s257, 8
      %s259 = scalar_lea.vmem %s3, %s258
      %s260 = sld [smem:[#allocation4 + %s25]]
      %s261 = smul.u32 8, %s26
      %p262 = scmp.lt.s32.totalorder %s25, 6
      %s263 = scalar_select %p262, %s25, 6
      %s264 = smul.addr %s263, 8
      %s265 = scalar_lea.vmem %s4, %s264
      %p266 = scmp.eq.s32.totalorder %s26, 0
      // Predicated region
      $region33: #{mixtral_sparse_moe.1} parent=31 // pred_check
        %p267 = pneg %p266
      $region34: #{mixtral_sparse_moe.1} parent=31 // pred_check_branch
        %269 = sbr.rel (%p267) target = $region36
      $region35: #{mixtral_sparse_moe.1} parent=31 // pred_region
        %vm270 = vcmask 261120
        %271 = vst.msk [vmem:[#allocation2] sm:$0xff] %vm270, 0.0
      $region36: #{mixtral_sparse_moe.1} parent=31 // pred_fallthru
        _
      %v272 = vld [vmem:[%s239] sm:$0xff]
      %v273 = vld [vmem:[%s248] sm:$0xff]
      %v274 = vld [vmem:[%s248 + $0x8] sm:$0xff]
      %v275 = vld [vmem:[%s248 + $0x10] sm:$0xff]
      %v276 = vld [vmem:[%s248 + $0x18] sm:$0xff]
      %vm277 = vcmask 261120
      %v279 = vsel %vm277, %v272, 0
      %281 = vmatprep.subr.mxu0 0.0
      %282 = vmatpush1.msra.mxu0 %v273
      %283 = vmatprep.subr.mxu0 0.0
      %284 = vmatpush1.msra.mxu0 %v274
      %285 = vmatprep.subr.mxu0 0.0
      %286 = vmatpush1.msra.mxu0 %v275
      %287 = vmatprep.subr.mxu0 0.0
      %288 = vmatpush1.msra.mxu0 %v276
      %289 = vmatprep.subr.mxu0 0.0
      %290 = vmatpush1.msra.mxu0 0.0
      %291 = vmatprep.subr.mxu0 0.0
      %292 = vmatpush1.msra.mxu0 0.0
      %293 = vmatprep.subr.mxu0 0.0
      %294 = vmatpush1.msra.mxu0 0.0
      %295 = vmatprep.subr.mxu0 0.0
      %296 = vmatpush1.msra.mxu0 0.0
      %297 = vmatprep.subr.mxu0 0.0
      %298 = vmatpush1.msra.mxu0 0.0
      %299 = vmatprep.subr.mxu0 0.0
      %300 = vmatpush1.msra.mxu0 0.0
      %301 = vmatprep.subr.mxu0 0.0
      %302 = vmatpush1.msra.mxu0 0.0
      %303 = vmatprep.subr.mxu0 0.0
      %304 = vmatpush1.msra.mxu0 0.0
      %305 = vmatprep.subr.mxu0 0.0
      %306 = vmatpush1.msra.mxu0 0.0
      %307 = vmatprep.subr.mxu0 0.0
      %308 = vmatpush1.msra.mxu0 0.0
      %309 = vmatprep.subr.mxu0 0.0
      %310 = vmatpush1.msra.mxu0 0.0
      %311 = vmatprep.subr.mxu0 0.0
      %312 = vmatpush1.msra.mxu0 0.0
      %313 = vmatprep.subr.mxu0 0.0
      %314 = vmatpush1.msra.mxu0 0.0
      %315 = vmatprep.subr.mxu0 0.0
      %316 = vmatpush1.msra.mxu0 0.0
      %317 = vmatprep.subr.mxu0 0.0
      %318 = vmatpush1.msra.mxu0 0.0
      %319 = vmatprep.subr.mxu0 0.0
      %320 = vmatpush1.msra.mxu0 0.0
      %321 = vmatprep.subr.mxu0 0.0
      %322 = vmatpush1.msra.mxu0 0.0
      %323 = vmatprep.subr.mxu0 0.0
      %324 = vmatpush1.msra.mxu0 0.0
      %325 = vmatprep.subr.mxu0 0.0
      %326 = vmatpush1.msra.mxu0 0.0
      %327 = vmatprep.subr.mxu0 0.0
      %328 = vmatpush1.msra.mxu0 0.0
      %329 = vmatprep.subr.mxu0 0.0
      %330 = vmatpush1.msra.mxu0 0.0
      %331 = vmatprep.subr.mxu0 0.0
      %332 = vmatpush1.msra.mxu0 0.0
      %333 = vmatprep.subr.mxu0 0.0
      %334 = vmatpush1.msra.mxu0 0.0
      %335 = vmatprep.subr.mxu0 0.0
      %336 = vmatpush1.msra.mxu0 0.0
      %337 = vmatprep.subr.mxu0 0.0
      %338 = vmatpush1.msra.mxu0 0.0
      %339 = vmatprep.subr.mxu0 0.0
      %340 = vmatpush1.msra.mxu0 0.0
      %341 = vmatprep.subr.mxu0 0.0
      %342 = vmatpush1.msra.mxu0 0.0
      %343 = vmatprep.subr.mxu0 0.0
      %344 = vmatpush1.msra.mxu0 0.0
      %345 = vmatprep.mubr.f32.mxu0 0.0
      %346 = vmatmul.mubr.f32.gmra.mrb[0].mxu0 %v279
      %v347 = vpop.f32.mrb[0].mxu0
      %v348 = vadd.f32 0.0, %v347
      %v349 = vpop.f32.mrb[0].mxu0
      %350 = vdwg.mxu0
      %v351 = vxor.u32 %v348, 2147483648
      %v352 = vmul.f32 %v351, 1.442695
      %v353 = vpow.pop %v352
      %v354 = vadd.f32 %v353, 1.0
      %v355 = vrcp.pop %v354
      %v356 = vmul.f32 1.0, %v355
      %v357 = vmul.f32 %v348, %v356
      %359 = vrot.lane.b32.xlu0 %v348, 64
      %v360 = vpop.permute.xlu0 %359
      %v362 = vmul.f32 %v357, %v360
      %v363 = vld [vmem:[#allocation2] sm:$0xff]
      %v364 = vld [vmem:[%s259] sm:$0xff]
      %v365 = vld [vmem:[%s259 + $0x8] sm:$0xff]
      %v366 = vld [vmem:[%s259 + $0x10] sm:$0xff]
      %v367 = vld [vmem:[%s259 + $0x18] sm:$0xff]
      %v368 = vld [vmem:[%s259 + $0x20] sm:$0xff]
      %v369 = vld [vmem:[%s259 + $0x28] sm:$0xff]
      %v370 = vld [vmem:[%s259 + $0x30] sm:$0xff]
      %v371 = vld [vmem:[%s259 + $0x38] sm:$0xff]
      %vm372 = vcmask 523264
      %v374 = vsel %vm372, %v362, 0
      %376 = vmatprep.subr.mxu0 0.0
      %377 = vmatpush1.msra.mxu0 %v364
      %378 = vmatprep.subr.mxu0 0.0
      %379 = vmatpush1.msra.mxu0 %v365
      %380 = vmatprep.subr.mxu0 0.0
      %381 = vmatpush1.msra.mxu0 %v366
      %382 = vmatprep.subr.mxu0 0.0
      %383 = vmatpush1.msra.mxu0 %v367
      %384 = vmatprep.subr.mxu0 0.0
      %385 = vmatpush1.msra.mxu0 %v368
      %386 = vmatprep.subr.mxu0 0.0
      %387 = vmatpush1.msra.mxu0 %v369
      %388 = vmatprep.subr.mxu0 0.0
      %389 = vmatpush1.msra.mxu0 %v370
      %390 = vmatprep.subr.mxu0 0.0
      %391 = vmatpush1.msra.mxu0 %v371
      %392 = vmatprep.subr.mxu0 0.0
      %393 = vmatpush1.msra.mxu0 0.0
      %394 = vmatprep.subr.mxu0 0.0
      %395 = vmatpush1.msra.mxu0 0.0
      %396 = vmatprep.subr.mxu0 0.0
      %397 = vmatpush1.msra.mxu0 0.0
      %398 = vmatprep.subr.mxu0 0.0
      %399 = vmatpush1.msra.mxu0 0.0
      %400 = vmatprep.subr.mxu0 0.0
      %401 = vmatpush1.msra.mxu0 0.0
      %402 = vmatprep.subr.mxu0 0.0
      %403 = vmatpush1.msra.mxu0 0.0
      %404 = vmatprep.subr.mxu0 0.0
      %405 = vmatpush1.msra.mxu0 0.0
      %406 = vmatprep.subr.mxu0 0.0
      %407 = vmatpush1.msra.mxu0 0.0
      %408 = vmatprep.subr.mxu0 0.0
      %409 = vmatpush1.msra.mxu0 0.0
      %410 = vmatprep.subr.mxu0 0.0
      %411 = vmatpush1.msra.mxu0 0.0
      %412 = vmatprep.subr.mxu0 0.0
      %413 = vmatpush1.msra.mxu0 0.0
      %414 = vmatprep.subr.mxu0 0.0
      %415 = vmatpush1.msra.mxu0 0.0
      %416 = vmatprep.subr.mxu0 0.0
      %417 = vmatpush1.msra.mxu0 0.0
      %418 = vmatprep.subr.mxu0 0.0
      %419 = vmatpush1.msra.mxu0 0.0
      %420 = vmatprep.subr.mxu0 0.0
      %421 = vmatpush1.msra.mxu0 0.0
      %422 = vmatprep.subr.mxu0 0.0
      %423 = vmatpush1.msra.mxu0 0.0
      %424 = vmatprep.subr.mxu0 0.0
      %425 = vmatpush1.msra.mxu0 0.0
      %426 = vmatprep.subr.mxu0 0.0
      %427 = vmatpush1.msra.mxu0 0.0
      %428 = vmatprep.subr.mxu0 0.0
      %429 = vmatpush1.msra.mxu0 0.0
      %430 = vmatprep.subr.mxu0 0.0
      %431 = vmatpush1.msra.mxu0 0.0
      %432 = vmatprep.subr.mxu0 0.0
      %433 = vmatpush1.msra.mxu0 0.0
      %434 = vmatprep.subr.mxu0 0.0
      %435 = vmatpush1.msra.mxu0 0.0
      %436 = vmatprep.subr.mxu0 0.0
      %437 = vmatpush1.msra.mxu0 0.0
      %438 = vmatprep.subr.mxu0 0.0
      %439 = vmatpush1.msra.mxu0 0.0
      %440 = vmatprep.mubr.f32.mxu0 0.0
      %441 = vmatmul.mubr.f32.gmra.mrb[0].mxu0 %v374
      %v442 = vpop.f32.mrb[0].mxu0
      %v443 = vadd.f32 0.0, %v442
      %v444 = vpop.f32.mrb[0].mxu0
      %445 = vdwg.mxu0
      %v446 = vadd.f32 %v363, %v443
      %447 = vst.msk [vmem:[#allocation2] sm:$0xff] %vm277, %v446
      // Predicated region
      $region37: #{mixtral_sparse_moe.1} parent=31 // pred_check
        %p448 = pneg %p266
      $region38: #{mixtral_sparse_moe.1} parent=31 // pred_check_branch
        %450 = sbr.rel (%p448) target = $region40
      $region39: #{mixtral_sparse_moe.1} parent=31 // pred_region
        %v451 = vld [vmem:[#allocation2] sm:$0xff]
        %452 = vst.msk [vmem:[%s265] sm:$0xff] %vm277, %v451
      $region40: #{mixtral_sparse_moe.1} parent=31 // pred_fallthru
        _
      %p453 = scmp.lt.s32.totalorder %s25, 6
      %s454 = scalar_select %p453, %s25, 6
      %s455 = smul.addr %s454, 8
      %s456 = scalar_lea.vmem %s4, %s455
      // Predicated region
      $region41: #{mixtral_sparse_moe.1} parent=31 // pred_check
        %p457 = pneg %p137
      $region42: #{mixtral_sparse_moe.1} parent=31 // pred_check_branch
        %459 = sbr.rel (%p457) target = $region44
      $region43: #{mixtral_sparse_moe.1} parent=31 // pred_region
        _
      $region44: #{mixtral_sparse_moe.1} parent=31 // pred_fallthru
        _
    $region32: #{mixtral_sparse_moe.1} parent=5 // pred_fallthru
      _
    %p460 = scmp.le.s32.totalorder 2, %s16
    // Predicated region
    $region45: #{mixtral_sparse_moe.1} parent=5 // pred_check
      %p461 = pneg %p460
    $region46: #{mixtral_sparse_moe.1} parent=5 // pred_check_branch
      %463 = sbr.rel (%p461) target = $region48
    $region47: #{mixtral_sparse_moe.1} parent=5 // pred_region
      %s464 = ssub.s32 %s16, 2
      // Predicated region
      $region49: #{mixtral_sparse_moe.1} parent=47 // pred_check
        %p465 = pneg %p143
      $region50: #{mixtral_sparse_moe.1} parent=47 // pred_check_branch
        %467 = sbr.rel (%p465) target = $region52
      $region51: #{mixtral_sparse_moe.1} parent=47 // pred_region
        %p468 = scmp.lt.s32.totalorder %s27, 6
        %s469 = scalar_select %p468, %s27, 6
        %s470 = smul.addr %s469, 8
        %s471 = scalar_lea.vmem %s4, %s470
      $region52: #{mixtral_sparse_moe.1} parent=47 // pred_fallthru
        _
    $region48: #{mixtral_sparse_moe.1} parent=5 // pred_fallthru
      _
  $region6: #{mixtral_sparse_moe.1} parent=0 // loop_footer
    %s20 = sadd.s32 1, %s16
  $region7: #{mixtral_sparse_moe.1} parent=0 // loop_footer_branch
    %15 = sbr.rel target = $region3
  $region8: #{mixtral_sparse_moe.1} parent=0 // loop_exit
    _

</llo_original>
